<compile_context>
chip_gen: v6e
topology: v6e:2x2x1
jax: 0.10.0
libtpu: 0.0.40
codegen_flags: <defaults>
</compile_context>

<pallas_src>
import jax
import jax.numpy as jnp
from jax.experimental import pallas as pl
from jax.experimental.pallas import tpu as pltpu

LANES = 128
HIDDEN1 = 128        # first hidden width (already lane-aligned)
HIDDEN2 = 64
HIDDEN2_PAD = 128    # second hidden width, padded 64 -> 128 (exact zeros)
BATCH_GRAIN = 1024   # tile granularity so packed output blocks are (>=8, 128)


def _round_up(x, m):
    return (x + m - 1) // m * m


def _mlp_kernel(x_ref, w1_ref, b1_ref, w2_ref, b2_ref, w3_ref, b3_ref, o_ref):
    """Fused 3-layer MLP. Output packed: 128 batch rows per 128-lane output row."""
    x = x_ref[...].astype(jnp.bfloat16)

    h1 = jnp.dot(x, w1_ref[...], preferred_element_type=jnp.float32) + b1_ref[...]
    h1 = jnp.maximum(h1, 0.0)

    h2 = jnp.dot(h1.astype(jnp.bfloat16), w2_ref[...],
                 preferred_element_type=jnp.float32) + b2_ref[...]
    h2 = jnp.maximum(h2, 0.0)

    # Final layer (output width 1): f32 VPU multiply by the broadcast w3 row +
    # cross-lane reduce (XLU), repacked so 128 consecutive batch rows land on
    # the 128 lanes of one output row -> lane-dense store, no padding to HBM.
    rows, lanes = o_ref.shape                        # (tile // 128, 128)
    h2_3d = h2.reshape(rows, lanes, HIDDEN2_PAD)     # leading-dim split (cheap)
    out = jnp.sum(h2_3d * w3_ref[...], axis=-1) + b3_ref[...]
    o_ref[...] = out.astype(o_ref.dtype)


def prepare_params(params):
    """One-time parameter prep: pad to lane-friendly shapes, cast MXU weights to
    bf16. Hoisted out of the forward so every call doesn't repay it."""
    w1, b1, w2, b2, w3, b3 = params

    w2p = jnp.zeros((HIDDEN1, HIDDEN2_PAD), jnp.float32).at[:, : w2.shape[1]].set(w2)
    b2p = jnp.zeros((1, HIDDEN2_PAD), jnp.float32).at[:, : b2.shape[1]].set(b2)
    # w3 (64,1) -> broadcastable row (1,128), zero-padded; stays f32 (VPU layer).
    w3row = jnp.zeros((1, HIDDEN2_PAD), jnp.float32).at[0, : w3.shape[0]].set(w3[:, 0])
    # scalar bias broadcast across all 128 lanes (each lane = one batch row).
    b3row = jnp.zeros((1, LANES), jnp.float32) + b3.reshape(1, 1).astype(jnp.float32)

    return (w1.astype(jnp.bfloat16), b1.astype(jnp.float32),
            w2p.astype(jnp.bfloat16), b2p, w3row, b3row)


def _choose_tiling(B, tile_b):
    """Batch tile: multiple of 128 (single step) or of 1024 (multi-step, keeps
    the packed output block (8,128)-aligned); balanced so padding is small and
    >=2 grid steps for large batches (v7x megacore)."""
    b_lane = _round_up(B, LANES)
    if b_lane <= BATCH_GRAIN:
        return b_lane, b_lane                                   # one small step
    b_grain = _round_up(B, BATCH_GRAIN)
    n_steps = max(2, pl.cdiv(b_grain, max(tile_b, BATCH_GRAIN)))
    tile = _round_up(pl.cdiv(b_grain, n_steps), BATCH_GRAIN)    # balanced tiles
    n_steps = pl.cdiv(b_grain, tile)
    return tile, n_steps * tile


def value_net_forward(x, prepared_params, tile_b=8192):
    """x: (B, state_dim) f32 (bf16 also accepted). Returns (B, 1) f32."""
    w1_bf, b1, w2_bf, b2p, w3row, b3row = prepared_params
    B, state_dim = x.shape

    tile, b_pad = _choose_tiling(B, tile_b)
    if b_pad != B:
        x = jnp.pad(x, ((0, b_pad - B), (0, 0)))
    grid = (b_pad // tile,)
    out_rows = tile // LANES

    # x / out tiled over batch; params VMEM-resident via constant index_map.
    # TODO(synk): add pipeline_mode=pl.Buffered(3) on x_spec if a profile shows
    # exposed DMA at grid-step boundaries.
    x_spec = pl.BlockSpec((tile, state_dim), lambda i: (i, 0))
    out_spec = pl.BlockSpec((out_rows, LANES), lambda i: (i, 0))
    const2d = lambda shape: pl.BlockSpec(shape, lambda i: (0, 0))

    weight_bytes = (state_dim * HIDDEN1 + HIDDEN1 * HIDDEN2_PAD) * 2 + 4 * LANES * 4
    cost = pl.CostEstimate(
        flops=2 * b_pad * (state_dim * HIDDEN1 + HIDDEN1 * HIDDEN2_PAD + HIDDEN2_PAD),
        transcendentals=0,
        bytes_accessed=(b_pad * state_dim * x.dtype.itemsize
                        + weight_bytes + b_pad * 4),
    )

    out = pl.pallas_call(
        _mlp_kernel,
        out_shape=jax.ShapeDtypeStruct((b_pad // LANES, LANES), jnp.float32),
        grid=grid,
        in_specs=[
            x_spec,
            const2d(w1_bf.shape), const2d(b1.shape),
            const2d(w2_bf.shape), const2d(b2p.shape),
            const2d(w3row.shape), const2d(b3row.shape),
        ],
        out_specs=out_spec,
        compiler_params=pltpu.CompilerParams(
            dimension_semantics=("parallel",),
            vmem_limit_bytes=32 * 1024 * 1024,
        ),
        cost_estimate=cost,
    )(x, w1_bf, b1, w2_bf, b2p, w3row, b3row)

    # Packed (b_pad//128, 128) -> (B, 1): row-major flatten matches batch order.
    return out.reshape(b_pad, 1)[:B]


def init_params(key, state_dim):
    """Deterministic init matching nn.Linear's U(-1/sqrt(fan_in), 1/sqrt(fan_in))."""

    def linear(key, fan_in, fan_out):
        kw, kb = jax.random.split(key)
        bound = 1.0 / jnp.sqrt(fan_in)
        w = jax.random.uniform(kw, (fan_in, fan_out), jnp.float32, -bound, bound)
        b = jax.random.uniform(kb, (1, fan_out), jnp.float32, -bound, bound)
        return w, b

    k1, k2, k3 = jax.random.split(key, 3)
    w1, b1 = linear(k1, state_dim, HIDDEN1)
    w2, b2 = linear(k2, HIDDEN1, HIDDEN2)
    w3, b3 = linear(k3, HIDDEN2, 1)
    return (w1, b1, w2, b2, w3, b3)


def value_net_reference(x, params):
    w1, b1, w2, b2, w3, b3 = params
    h1 = jnp.maximum(x @ w1 + b1, 0.0)
    h2 = jnp.maximum(h1 @ w2 + b2, 0.0)
    return h2 @ w3 + b3


if __name__ == "__main__":
    key = jax.random.PRNGKey(0)
    k_param, k_x = jax.random.split(key)

    batch = 8
    state_dim = 32

    params = init_params(k_param, state_dim)
    prepared = prepare_params(params)          # one-time (hoisted out of forward)
    x = jax.random.normal(k_x, (batch, state_dim), jnp.float32)

    out = value_net_forward(x, prepared)
    out = jax.block_until_ready(out)

    ref = value_net_reference(x, params)
    assert out.shape == (batch, 1), out.shape
    # bf16 matmul operands (f32 accumulation) -> loose tolerance vs f32 reference.
    assert jnp.allclose(out, ref, atol=5e-2, rtol=5e-2), (out, ref)

    print("KERNEL_OK")
</pallas_src>

<mosaic_0001>
module attributes {stable_mosaic.version = 11 : i64} {
  func.func @_mlp_kernel(%arg0: i32, %arg1: memref<128x32xf32, #tpu.memory_space<vmem>>, %arg2: memref<32x128xbf16, #tpu.memory_space<vmem>>, %arg3: memref<1x128xf32, #tpu.memory_space<vmem>>, %arg4: memref<128x128xbf16, #tpu.memory_space<vmem>>, %arg5: memref<1x128xf32, #tpu.memory_space<vmem>>, %arg6: memref<1x128xf32, #tpu.memory_space<vmem>>, %arg7: memref<1x128xf32, #tpu.memory_space<vmem>>, %arg8: memref<1x128xf32, #tpu.memory_space<vmem>>) attributes {dimension_semantics = [#tpu.dimension_semantics<parallel>], iteration_bounds = array<i64: 1>, scalar_prefetch = 0 : i64, scratch_operands = 0 : i64, tpu.core_type = #tpu.core_type<tc>, window_params = [{transform_indices = @transform_0, window_bounds = array<i64: 128, 32>}, {pipeline_mode = #tpu.pipeline_mode<synchronous>, transform_indices = @transform_1, window_bounds = array<i64: 32, 128>}, {pipeline_mode = #tpu.pipeline_mode<synchronous>, transform_indices = @transform_2, window_bounds = array<i64: 1, 128>}, {pipeline_mode = #tpu.pipeline_mode<synchronous>, transform_indices = @transform_3, window_bounds = array<i64: 128, 128>}, {pipeline_mode = #tpu.pipeline_mode<synchronous>, transform_indices = @transform_4, window_bounds = array<i64: 1, 128>}, {pipeline_mode = #tpu.pipeline_mode<synchronous>, transform_indices = @transform_5, window_bounds = array<i64: 1, 128>}, {pipeline_mode = #tpu.pipeline_mode<synchronous>, transform_indices = @transform_6, window_bounds = array<i64: 1, 128>}, {transform_indices = @transform_7, window_bounds = array<i64: 1, 128>}]} {
    %c0 = arith.constant 0 : index
    %c0_0 = arith.constant 0 : index
    %0 = vector.load %arg1[%c0, %c0_0] : memref<128x32xf32, #tpu.memory_space<vmem>>, vector<128x32xf32>
    %1 = arith.truncf %0 : vector<128x32xf32> to vector<128x32xbf16>
    %c0_1 = arith.constant 0 : index
    %c0_2 = arith.constant 0 : index
    %2 = vector.load %arg2[%c0_1, %c0_2] : memref<32x128xbf16, #tpu.memory_space<vmem>>, vector<32x128xbf16>
    %cst = arith.constant dense<0.000000e+00> : vector<128x128xf32>
    %3 = tpu.matmul %1, %2, %cst {dimension_numbers = #tpu.dot_dimension_numbers<[1], [0], [0], [1], [0, 0, 1, 1], [], []>} : vector<128x32xbf16>, vector<32x128xbf16>, vector<128x128xf32> -> vector<128x128xf32>
    %c0_3 = arith.constant 0 : index
    %c0_4 = arith.constant 0 : index
    %4 = vector.load %arg3[%c0_3, %c0_4] : memref<1x128xf32, #tpu.memory_space<vmem>>, vector<1x128xf32>
    %5 = vector.broadcast %4 : vector<1x128xf32> to vector<128x128xf32>
    %6 = arith.addf %3, %5 : vector<128x128xf32>
    %cst_5 = arith.constant 0.000000e+00 : f32
    %7 = vector.broadcast %cst_5 : f32 to vector<128x128xf32>
    %8 = arith.maximumf %6, %7 : vector<128x128xf32>
    %9 = arith.truncf %8 : vector<128x128xf32> to vector<128x128xbf16>
    %c0_6 = arith.constant 0 : index
    %c0_7 = arith.constant 0 : index
    %10 = vector.load %arg4[%c0_6, %c0_7] : memref<128x128xbf16, #tpu.memory_space<vmem>>, vector<128x128xbf16>
    %cst_8 = arith.constant dense<0.000000e+00> : vector<128x128xf32>
    %11 = tpu.matmul %9, %10, %cst_8 {dimension_numbers = #tpu.dot_dimension_numbers<[1], [0], [0], [1], [0, 0, 1, 1], [], []>} : vector<128x128xbf16>, vector<128x128xbf16>, vector<128x128xf32> -> vector<128x128xf32>
    %c0_9 = arith.constant 0 : index
    %c0_10 = arith.constant 0 : index
    %12 = vector.load %arg5[%c0_9, %c0_10] : memref<1x128xf32, #tpu.memory_space<vmem>>, vector<1x128xf32>
    %13 = vector.broadcast %12 : vector<1x128xf32> to vector<128x128xf32>
    %14 = arith.addf %11, %13 : vector<128x128xf32>
    %cst_11 = arith.constant 0.000000e+00 : f32
    %15 = vector.broadcast %cst_11 : f32 to vector<128x128xf32>
    %16 = arith.maximumf %14, %15 : vector<128x128xf32>
    %17 = vector.shape_cast %16 : vector<128x128xf32> to vector<1x128x128xf32>
    %c0_12 = arith.constant 0 : index
    %c0_13 = arith.constant 0 : index
    %18 = vector.load %arg6[%c0_12, %c0_13] : memref<1x128xf32, #tpu.memory_space<vmem>>, vector<1x128xf32>
    %19 = vector.shape_cast %18 : vector<1x128xf32> to vector<1x1x128xf32>
    %20 = vector.broadcast %19 : vector<1x1x128xf32> to vector<1x128x128xf32>
    %21 = arith.mulf %17, %20 : vector<1x128x128xf32>
    %cst_14 = arith.constant dense<0.000000e+00> : vector<1x128xf32>
    %22 = vector.multi_reduction <add>, %21, %cst_14 [2] : vector<1x128x128xf32> to vector<1x128xf32>
    %c0_15 = arith.constant 0 : index
    %c0_16 = arith.constant 0 : index
    %23 = vector.load %arg7[%c0_15, %c0_16] : memref<1x128xf32, #tpu.memory_space<vmem>>, vector<1x128xf32>
    %24 = arith.addf %22, %23 : vector<1x128xf32>
    %c0_17 = arith.constant 0 : index
    %c0_18 = arith.constant 0 : index
    %25 = vector.load %arg8[%c0_17, %c0_18] : memref<1x128xf32, #tpu.memory_space<vmem>>, vector<1x128xf32>
    tpu.vector_store %arg8[%c0_17, %c0_18], %24 {strides = array<i32>} : memref<1x128xf32, #tpu.memory_space<vmem>>, vector<1x128xf32>,
    return
  }
  func.func @transform_0(%arg0: i32) -> (i32, i32) {
    %c0_i32 = arith.constant 0 : i32
    %c0_i32_0 = arith.constant 0 : i32
    return %arg0, %c0_i32 : i32, i32
  }
  func.func @transform_1(%arg0: i32) -> (i32, i32) {
    %c0_i32 = arith.constant 0 : i32
    %c0_i32_0 = arith.constant 0 : i32
    %c0_i32_1 = arith.constant 0 : i32
    return %c0_i32, %c0_i32_0 : i32, i32
  }
  func.func @transform_2(%arg0: i32) -> (i32, i32) {
    %c0_i32 = arith.constant 0 : i32
    %c0_i32_0 = arith.constant 0 : i32
    %c0_i32_1 = arith.constant 0 : i32
    return %c0_i32, %c0_i32_0 : i32, i32
  }
  func.func @transform_3(%arg0: i32) -> (i32, i32) {
    %c0_i32 = arith.constant 0 : i32
    %c0_i32_0 = arith.constant 0 : i32
    %c0_i32_1 = arith.constant 0 : i32
    return %c0_i32, %c0_i32_0 : i32, i32
  }
  func.func @transform_4(%arg0: i32) -> (i32, i32) {
    %c0_i32 = arith.constant 0 : i32
    %c0_i32_0 = arith.constant 0 : i32
    %c0_i32_1 = arith.constant 0 : i32
    return %c0_i32, %c0_i32_0 : i32, i32
  }
  func.func @transform_5(%arg0: i32) -> (i32, i32) {
    %c0_i32 = arith.constant 0 : i32
    %c0_i32_0 = arith.constant 0 : i32
    %c0_i32_1 = arith.constant 0 : i32
    return %c0_i32, %c0_i32_0 : i32, i32
  }
  func.func @transform_6(%arg0: i32) -> (i32, i32) {
    %c0_i32 = arith.constant 0 : i32
    %c0_i32_0 = arith.constant 0 : i32
    %c0_i32_1 = arith.constant 0 : i32
    return %c0_i32, %c0_i32_0 : i32, i32
  }
  func.func @transform_7(%arg0: i32) -> (i32, i32) {
    %c0_i32 = arith.constant 0 : i32
    %c0_i32_0 = arith.constant 0 : i32
    return %arg0, %c0_i32 : i32, i32
  }
}

</mosaic_0001>

<llo_original>
// kernel: tpu_custom_call.1
$region0: #{tpu_custom_call.1}
  #allocation0 [shape = 'u32[]', space=smem, size = 0x4, offset = 0x4, fixed_abs, tag = 'smem constant byte address 0x4 - core index']
  #allocation1 [shape = 'u32[144,128]{1,0:T(1,128)}', space=vmem, size = 0x12000, scoped, tag = 'internal scratch']
  %s0 = inlined_call_operand.vmem [shape: f32[128,32], index: 0, kind: input, shape index: {}]
  %s1 = inlined_call_operand.vmem [shape: bf16[32,128], index: 1, kind: input, shape index: {}]
  %s2 = inlined_call_operand.vmem [shape: f32[1,128], index: 2, kind: input, shape index: {}]
  %s3 = inlined_call_operand.vmem [shape: bf16[128,128], index: 3, kind: input, shape index: {}]
  %s4 = inlined_call_operand.vmem [shape: f32[1,128], index: 4, kind: input, shape index: {}]
  %s5 = inlined_call_operand.vmem [shape: f32[1,128], index: 5, kind: input, shape index: {}]
  %s6 = inlined_call_operand.vmem [shape: f32[1,128], index: 6, kind: input, shape index: {}]
  %s7 = inlined_call_operand.hbm [shape: f32[1,128], index: 7, kind: output, shape index: {}]
  %s8 = sld [smem:[#allocation0]]
  $region38: #{tpu_custom_call.1} parent=0
    _
  %s10 = ssub.s32 1, %s8
  %s11 = scalar_select 0, %s10, %s8
  $region1: #{tpu_custom_call.1} parent=0
    #allocation2 [shape = 'u8[512]{0}', space=vmem, size = 0x400, scoped, tag = 'output window, operand 0, single buffered']
    #allocation3 [shape = 's32[1]{0}', space=sflag, size = 0x4, scoped, tag = 'scoped memory for tpu_custom_call.1']
    %12 = vsyncpa [#allocation3], 0
    // Predicated region
    $region2: #{tpu_custom_call.1} parent=1 // pred_check
      _
    $region3: #{tpu_custom_call.1} parent=1 // pred_check_branch
      %14 = sbr.rel (0) target = $region5
    $region4: #{tpu_custom_call.1} parent=1 // pred_region
      _
    $region5: #{tpu_custom_call.1} parent=1 // pred_fallthru
      _
    // Predicated region
    $region6: #{tpu_custom_call.1} parent=1 // pred_check
      _
    $region7: #{tpu_custom_call.1} parent=1 // pred_check_branch
      %16 = sbr.rel (0) target = $region9
    $region8: #{tpu_custom_call.1} parent=1 // pred_region
      _
    $region9: #{tpu_custom_call.1} parent=1 // pred_fallthru
      _
    // Predicated region
    $region10: #{tpu_custom_call.1} parent=1 // pred_check
      _
    $region11: #{tpu_custom_call.1} parent=1 // pred_check_branch
      %18 = sbr.rel (0) target = $region13
    $region12: #{tpu_custom_call.1} parent=1 // pred_region
      _
    $region13: #{tpu_custom_call.1} parent=1 // pred_fallthru
      _
    // Predicated region
    $region14: #{tpu_custom_call.1} parent=1 // pred_check
      _
    $region15: #{tpu_custom_call.1} parent=1 // pred_check_branch
      %20 = sbr.rel (0) target = $region17
    $region16: #{tpu_custom_call.1} parent=1 // pred_region
      _
    $region17: #{tpu_custom_call.1} parent=1 // pred_fallthru
      _
    // Predicated region
    $region18: #{tpu_custom_call.1} parent=1 // pred_check
      _
    $region19: #{tpu_custom_call.1} parent=1 // pred_check_branch
      %22 = sbr.rel (0) target = $region21
    $region20: #{tpu_custom_call.1} parent=1 // pred_region
      _
    $region21: #{tpu_custom_call.1} parent=1 // pred_fallthru
      _
    // Predicated region
    $region22: #{tpu_custom_call.1} parent=1 // pred_check
      _
    $region23: #{tpu_custom_call.1} parent=1 // pred_check_branch
      %24 = sbr.rel (0) target = $region25
    $region24: #{tpu_custom_call.1} parent=1 // pred_region
      _
    $region25: #{tpu_custom_call.1} parent=1 // pred_fallthru
      _
    // Predicated region
    $region26: #{tpu_custom_call.1} parent=1 // pred_check
      _
    $region27: #{tpu_custom_call.1} parent=1 // pred_check_branch
      %26 = sbr.rel (0) target = $region29
    $region28: #{tpu_custom_call.1} parent=1 // pred_region
      _
    $region29: #{tpu_custom_call.1} parent=1 // pred_fallthru
      _
    %v28 = vld [vmem:[%s0] sm:$0xff]
    %v29 = vld [vmem:[%s0 + $0x8] sm:$0xff]
    %v30 = vld [vmem:[%s0 + $0x10] sm:$0xff]
    %v31 = vld [vmem:[%s0 + $0x18] sm:$0xff]
    %v32 = vld [vmem:[%s0 + $0x20] sm:$0xff]
    %v33 = vld [vmem:[%s0 + $0x28] sm:$0xff]
    %v34 = vld [vmem:[%s0 + $0x30] sm:$0xff]
    %v35 = vld [vmem:[%s0 + $0x38] sm:$0xff]
    %v36 = vld [vmem:[%s0 + $0x40] sm:$0xff]
    %v37 = vld [vmem:[%s0 + $0x48] sm:$0xff]
    %v38 = vld [vmem:[%s0 + $0x50] sm:$0xff]
    %v39 = vld [vmem:[%s0 + $0x58] sm:$0xff]
    %v40 = vld [vmem:[%s0 + $0x60] sm:$0xff]
    %v41 = vld [vmem:[%s0 + $0x68] sm:$0xff]
    %v42 = vld [vmem:[%s0 + $0x70] sm:$0xff]
    %v43 = vld [vmem:[%s0 + $0x78] sm:$0xff]
    %v44 = vpack.c.bf16 %v29, %v28
    %v45 = vpack.c.bf16 %v31, %v30
    %v46 = vpack.c.bf16 %v33, %v32
    %v47 = vpack.c.bf16 %v35, %v34
    %v48 = vpack.c.bf16 %v37, %v36
    %v49 = vpack.c.bf16 %v39, %v38
    %v50 = vpack.c.bf16 %v41, %v40
    %v51 = vpack.c.bf16 %v43, %v42
    %v52 = vld [vmem:[%s1] sm:$0xf]
    %v53 = vld [vmem:[%s1 + $0x4] sm:$0xf]
    %v54 = vld [vmem:[%s1 + $0x8] sm:$0xf]
    %v55 = vld [vmem:[%s1 + $0xc] sm:$0xf]
    %v56 = vld [vmem:[%s2] sm:$0x1]
    %v58 = vlaneseq
    %v59 = vshrl.u32 %v58, 7
    %v60 = vsub.s32 0, %v59
    %v61 = vrot.slane %v56, %v60
    %v67 = vunpack.c.l.b16 %v52
    %v68 = vunpack.c.l.b16 %v53
    %v69 = vunpack.c.l.b16 %v54
    %v70 = vunpack.c.l.b16 %v55
    %v71 = vpack.c.b16 %v68, %v67
    %v72 = vpack.c.b16 %v70, %v69
    %vm75 = vcmask 261120
    %v77 = vsel %vm75, %v44, 0
    %v80 = vsel %vm75, %v45, 0
    %v83 = vsel %vm75, %v46, 0
    %v86 = vsel %vm75, %v47, 0
    %v89 = vsel %vm75, %v48, 0
    %v92 = vsel %vm75, %v49, 0
    %v95 = vsel %vm75, %v50, 0
    %v98 = vsel %vm75, %v51, 0
    %100 = vmatprep.subr.bf16.mxu0 0
    %101 = vmatpush1.bf16.msra.mxu0 0
    %102 = vmatprep.subr.bf16.mxu0 0
    %103 = vmatpush1.bf16.msra.mxu0 0
    %104 = vmatprep.subr.bf16.mxu0 0
    %105 = vmatpush1.bf16.msra.mxu0 0
    %106 = vmatprep.subr.bf16.mxu0 0
    %107 = vmatpush1.bf16.msra.mxu0 0
    %108 = vmatprep.subr.bf16.mxu0 0
    %109 = vmatpush1.bf16.msra.mxu0 0
    %110 = vmatprep.subr.bf16.mxu0 0
    %111 = vmatpush1.bf16.msra.mxu0 0
    %112 = vmatprep.subr.bf16.mxu0 0
    %113 = vmatpush1.bf16.msra.mxu0 %v72
    %114 = vmatprep.subr.bf16.mxu0 0
    %115 = vmatpush1.bf16.msra.mxu0 %v71
    %116 = vmatprep.subr.bf16.mxu0 0
    %117 = vmatpush2.bf16.msra.mxu0 0
    %118 = vmatprep.subr.bf16.mxu0 0
    %119 = vmatpush2.bf16.msra.mxu0 0
    %120 = vmatprep.subr.bf16.mxu0 0
    %121 = vmatpush2.bf16.msra.mxu0 0
    %122 = vmatprep.subr.bf16.mxu0 0
    %123 = vmatpush2.bf16.msra.mxu0 0
    %124 = vmatprep.subr.bf16.mxu0 0
    %125 = vmatpush2.bf16.msra.mxu0 0
    %126 = vmatprep.subr.bf16.mxu0 0
    %127 = vmatpush2.bf16.msra.mxu0 0
    %128 = vmatprep.subr.bf16.mxu0 0
    %129 = vmatpush2.bf16.msra.mxu0 0
    %130 = vmatprep.subr.bf16.mxu0 0
    %131 = vmatpush2.bf16.msra.mxu0 0
    %132 = vmatprep.mubr.bf16.mxu0 0
    %133 = vmatmul.mubr.bf16.gmra.mxu0 %v77
    %v134 = vpop.f32.mrf.mxu0
    %v135 = vadd.f32 %v61, %v134
    %v136 = vpop.f32.mrf.mxu0
    %v137 = vpop.f32.mrf.mxu0
    %v138 = vadd.f32 %v61, %v137
    %v139 = vpop.f32.mrf.mxu0
    %140 = vmatprep.mubr.bf16.mxu0 0
    %141 = vmatmul.mubr.bf16.gmra.mxu0 %v80
    %v142 = vpop.f32.mrf.mxu0
    %v143 = vadd.f32 %v61, %v142
    %v144 = vpop.f32.mrf.mxu0
    %v145 = vpop.f32.mrf.mxu0
    %v146 = vadd.f32 %v61, %v145
    %v147 = vpop.f32.mrf.mxu0
    %148 = vmatprep.mubr.bf16.mxu0 0
    %149 = vmatmul.mubr.bf16.gmra.mxu0 %v83
    %v150 = vpop.f32.mrf.mxu0
    %v151 = vadd.f32 %v61, %v150
    %v152 = vpop.f32.mrf.mxu0
    %v153 = vpop.f32.mrf.mxu0
    %v154 = vadd.f32 %v61, %v153
    %v155 = vpop.f32.mrf.mxu0
    %156 = vmatprep.mubr.bf16.mxu0 0
    %157 = vmatmul.mubr.bf16.gmra.mxu0 %v86
    %v158 = vpop.f32.mrf.mxu0
    %v159 = vadd.f32 %v61, %v158
    %v160 = vpop.f32.mrf.mxu0
    %v161 = vpop.f32.mrf.mxu0
    %v162 = vadd.f32 %v61, %v161
    %v163 = vpop.f32.mrf.mxu0
    %164 = vmatprep.mubr.bf16.mxu0 0
    %165 = vmatmul.mubr.bf16.gmra.mxu0 %v89
    %v166 = vpop.f32.mrf.mxu0
    %v167 = vadd.f32 %v61, %v166
    %v168 = vpop.f32.mrf.mxu0
    %v169 = vpop.f32.mrf.mxu0
    %v170 = vadd.f32 %v61, %v169
    %v171 = vpop.f32.mrf.mxu0
    %172 = vmatprep.mubr.bf16.mxu0 0
    %173 = vmatmul.mubr.bf16.gmra.mxu0 %v92
    %v174 = vpop.f32.mrf.mxu0
    %v175 = vadd.f32 %v61, %v174
    %v176 = vpop.f32.mrf.mxu0
    %v177 = vpop.f32.mrf.mxu0
    %v178 = vadd.f32 %v61, %v177
    %v179 = vpop.f32.mrf.mxu0
    %180 = vmatprep.mubr.bf16.mxu0 0
    %181 = vmatmul.mubr.bf16.gmra.mxu0 %v95
    %v182 = vpop.f32.mrf.mxu0
    %v183 = vadd.f32 %v61, %v182
    %v184 = vpop.f32.mrf.mxu0
    %v185 = vpop.f32.mrf.mxu0
    %v186 = vadd.f32 %v61, %v185
    %v187 = vpop.f32.mrf.mxu0
    %188 = vmatprep.mubr.bf16.mxu0 0
    %189 = vmatmul.mubr.bf16.gmra.mxu0 %v98
    %v190 = vpop.f32.mrf.mxu0
    %v191 = vadd.f32 %v61, %v190
    %v192 = vpop.f32.mrf.mxu0
    %v193 = vpop.f32.mrf.mxu0
    %v194 = vadd.f32 %v61, %v193
    %v195 = vpop.f32.mrf.mxu0
    %196 = vdwg.mxu0
    %v197 = vmax.f32 %v135, 0.0
    %v198 = vmax.f32 %v138, 0.0
    %v199 = vmax.f32 %v143, 0.0
    %v200 = vmax.f32 %v146, 0.0
    %v201 = vmax.f32 %v151, 0.0
    %v202 = vmax.f32 %v154, 0.0
    %v203 = vmax.f32 %v159, 0.0
    %v204 = vmax.f32 %v162, 0.0
    %v205 = vmax.f32 %v167, 0.0
    %v206 = vmax.f32 %v170, 0.0
    %v207 = vmax.f32 %v175, 0.0
    %v208 = vmax.f32 %v178, 0.0
    %v209 = vmax.f32 %v183, 0.0
    %v210 = vmax.f32 %v186, 0.0
    %v211 = vmax.f32 %v191, 0.0
    %v212 = vmax.f32 %v194, 0.0
    %v213 = vpack.c.bf16 %v198, %v197
    %v214 = vpack.c.bf16 %v200, %v199
    %v215 = vpack.c.bf16 %v202, %v201
    %v216 = vpack.c.bf16 %v204, %v203
    %v217 = vpack.c.bf16 %v206, %v205
    %v218 = vpack.c.bf16 %v208, %v207
    %v219 = vpack.c.bf16 %v210, %v209
    %v220 = vpack.c.bf16 %v212, %v211
    %v221 = vld [vmem:[%s3] sm:$0xf]
    %v222 = vld [vmem:[%s3 + $0x4] sm:$0xf]
    %v223 = vld [vmem:[%s3 + $0x8] sm:$0xf]
    %v224 = vld [vmem:[%s3 + $0xc] sm:$0xf]
    %v225 = vld [vmem:[%s3 + $0x10] sm:$0xf]
    %v226 = vld [vmem:[%s3 + $0x14] sm:$0xf]
    %v227 = vld [vmem:[%s3 + $0x18] sm:$0xf]
    %v228 = vld [vmem:[%s3 + $0x1c] sm:$0xf]
    %v229 = vld [vmem:[%s3 + $0x20] sm:$0xf]
    %v230 = vld [vmem:[%s3 + $0x24] sm:$0xf]
    %v231 = vld [vmem:[%s3 + $0x28] sm:$0xf]
    %v232 = vld [vmem:[%s3 + $0x2c] sm:$0xf]
    %v233 = vld [vmem:[%s3 + $0x30] sm:$0xf]
    %v234 = vld [vmem:[%s3 + $0x34] sm:$0xf]
    %v235 = vld [vmem:[%s3 + $0x38] sm:$0xf]
    %v236 = vld [vmem:[%s3 + $0x3c] sm:$0xf]
    %v237 = vld [vmem:[%s4] sm:$0x1]
    %v239 = vlaneseq
    %v240 = vshrl.u32 %v239, 7
    %v241 = vsub.s32 0, %v240
    %v242 = vrot.slane %v237, %v241
    %v260 = vunpack.c.l.b16 %v221
    %v261 = vunpack.c.l.b16 %v222
    %v262 = vunpack.c.l.b16 %v223
    %v263 = vunpack.c.l.b16 %v224
    %v264 = vunpack.c.l.b16 %v225
    %v265 = vunpack.c.l.b16 %v226
    %v266 = vunpack.c.l.b16 %v227
    %v267 = vunpack.c.l.b16 %v228
    %v268 = vunpack.c.l.b16 %v229
    %v269 = vunpack.c.l.b16 %v230
    %v270 = vunpack.c.l.b16 %v231
    %v271 = vunpack.c.l.b16 %v232
    %v272 = vunpack.c.l.b16 %v233
    %v273 = vunpack.c.l.b16 %v234
    %v274 = vunpack.c.l.b16 %v235
    %v275 = vunpack.c.l.b16 %v236
    %v276 = vpack.c.b16 %v261, %v260
    %v277 = vpack.c.b16 %v263, %v262
    %v278 = vpack.c.b16 %v265, %v264
    %v279 = vpack.c.b16 %v267, %v266
    %v280 = vpack.c.b16 %v269, %v268
    %v281 = vpack.c.b16 %v271, %v270
    %v282 = vpack.c.b16 %v273, %v272
    %v283 = vpack.c.b16 %v275, %v274
    %292 = vmatprep.subr.bf16.mxu0 0
    %293 = vmatpush1.bf16.msra.mxu0 %v283
    %294 = vmatprep.subr.bf16.mxu0 0
    %295 = vmatpush1.bf16.msra.mxu0 %v282
    %296 = vmatprep.subr.bf16.mxu0 0
    %297 = vmatpush1.bf16.msra.mxu0 %v281
    %298 = vmatprep.subr.bf16.mxu0 0
    %299 = vmatpush1.bf16.msra.mxu0 %v280
    %300 = vmatprep.subr.bf16.mxu0 0
    %301 = vmatpush1.bf16.msra.mxu0 %v279
    %302 = vmatprep.subr.bf16.mxu0 0
    %303 = vmatpush1.bf16.msra.mxu0 %v278
    %304 = vmatprep.subr.bf16.mxu0 0
    %305 = vmatpush1.bf16.msra.mxu0 %v277
    %306 = vmatprep.subr.bf16.mxu0 0
    %307 = vmatpush1.bf16.msra.mxu0 %v276
    %308 = vmatprep.subr.bf16.mxu0 0
    %309 = vmatpush2.bf16.msra.mxu0 0
    %310 = vmatprep.subr.bf16.mxu0 0
    %311 = vmatpush2.bf16.msra.mxu0 0
    %312 = vmatprep.subr.bf16.mxu0 0
    %313 = vmatpush2.bf16.msra.mxu0 0
    %314 = vmatprep.subr.bf16.mxu0 0
    %315 = vmatpush2.bf16.msra.mxu0 0
    %316 = vmatprep.subr.bf16.mxu0 0
    %317 = vmatpush2.bf16.msra.mxu0 0
    %318 = vmatprep.subr.bf16.mxu0 0
    %319 = vmatpush2.bf16.msra.mxu0 0
    %320 = vmatprep.subr.bf16.mxu0 0
    %321 = vmatpush2.bf16.msra.mxu0 0
    %322 = vmatprep.subr.bf16.mxu0 0
    %323 = vmatpush2.bf16.msra.mxu0 0
    %324 = vmatprep.mubr.bf16.mxu0 0
    %325 = vmatmul.mubr.bf16.gmra.mxu0 %v213
    %v326 = vpop.f32.mrf.mxu0
    %v327 = vadd.f32 %v242, %v326
    %v328 = vpop.f32.mrf.mxu0
    %v329 = vpop.f32.mrf.mxu0
    %v330 = vadd.f32 %v242, %v329
    %v331 = vpop.f32.mrf.mxu0
    %332 = vmatprep.mubr.bf16.mxu0 0
    %333 = vmatmul.mubr.bf16.gmra.mxu0 %v214
    %v334 = vpop.f32.mrf.mxu0
    %v335 = vadd.f32 %v242, %v334
    %v336 = vpop.f32.mrf.mxu0
    %v337 = vpop.f32.mrf.mxu0
    %v338 = vadd.f32 %v242, %v337
    %v339 = vpop.f32.mrf.mxu0
    %340 = vmatprep.mubr.bf16.mxu0 0
    %341 = vmatmul.mubr.bf16.gmra.mxu0 %v215
    %v342 = vpop.f32.mrf.mxu0
    %v343 = vadd.f32 %v242, %v342
    %v344 = vpop.f32.mrf.mxu0
    %v345 = vpop.f32.mrf.mxu0
    %v346 = vadd.f32 %v242, %v345
    %v347 = vpop.f32.mrf.mxu0
    %348 = vmatprep.mubr.bf16.mxu0 0
    %349 = vmatmul.mubr.bf16.gmra.mxu0 %v216
    %v350 = vpop.f32.mrf.mxu0
    %v351 = vadd.f32 %v242, %v350
    %v352 = vpop.f32.mrf.mxu0
    %v353 = vpop.f32.mrf.mxu0
    %v354 = vadd.f32 %v242, %v353
    %v355 = vpop.f32.mrf.mxu0
    %356 = vmatprep.mubr.bf16.mxu0 0
    %357 = vmatmul.mubr.bf16.gmra.mxu0 %v217
    %v358 = vpop.f32.mrf.mxu0
    %v359 = vadd.f32 %v242, %v358
    %v360 = vpop.f32.mrf.mxu0
    %v361 = vpop.f32.mrf.mxu0
    %v362 = vadd.f32 %v242, %v361
    %v363 = vpop.f32.mrf.mxu0
    %364 = vmatprep.mubr.bf16.mxu0 0
    %365 = vmatmul.mubr.bf16.gmra.mxu0 %v218
    %v366 = vpop.f32.mrf.mxu0
    %v367 = vadd.f32 %v242, %v366
    %v368 = vpop.f32.mrf.mxu0
    %v369 = vpop.f32.mrf.mxu0
    %v370 = vadd.f32 %v242, %v369
    %v371 = vpop.f32.mrf.mxu0
    %372 = vmatprep.mubr.bf16.mxu0 0
    %373 = vmatmul.mubr.bf16.gmra.mxu0 %v219
    %v374 = vpop.f32.mrf.mxu0
    %v375 = vadd.f32 %v242, %v374
    %v376 = vpop.f32.mrf.mxu0
    %v377 = vpop.f32.mrf.mxu0
    %v378 = vadd.f32 %v242, %v377
    %v379 = vpop.f32.mrf.mxu0
    %380 = vmatprep.mubr.bf16.mxu0 0
    %381 = vmatmul.mubr.bf16.gmra.mxu0 %v220
    %v382 = vpop.f32.mrf.mxu0
    %v383 = vadd.f32 %v242, %v382
    %v384 = vpop.f32.mrf.mxu0
    %v385 = vpop.f32.mrf.mxu0
    %v386 = vadd.f32 %v242, %v385
    %v387 = vpop.f32.mrf.mxu0
    %388 = vdwg.mxu0
    %v389 = vmax.f32 %v327, 0.0
    %v390 = vmax.f32 %v330, 0.0
    %v391 = vmax.f32 %v335, 0.0
    %v392 = vmax.f32 %v338, 0.0
    %v393 = vmax.f32 %v343, 0.0
    %v394 = vmax.f32 %v346, 0.0
    %v395 = vmax.f32 %v351, 0.0
    %v396 = vmax.f32 %v354, 0.0
    %v397 = vmax.f32 %v359, 0.0
    %v398 = vmax.f32 %v362, 0.0
    %v399 = vmax.f32 %v367, 0.0
    %v400 = vmax.f32 %v370, 0.0
    %v401 = vmax.f32 %v375, 0.0
    %v402 = vmax.f32 %v378, 0.0
    %v403 = vmax.f32 %v383, 0.0
    %v404 = vmax.f32 %v386, 0.0
    %v405 = vld [vmem:[%s5] sm:$0x1]
    %v407 = vlaneseq
    %v408 = vshrl.u32 %v407, 7
    %v409 = vsub.s32 0, %v408
    %v410 = vrot.slane %v405, %v409
    %v412 = vmul.f32 %v389, %v410
    %v413 = vmul.f32 %v390, %v410
    %v414 = vmul.f32 %v391, %v410
    %v415 = vmul.f32 %v392, %v410
    %v416 = vmul.f32 %v393, %v410
    %v417 = vmul.f32 %v394, %v410
    %v418 = vmul.f32 %v395, %v410
    %v419 = vmul.f32 %v396, %v410
    %v420 = vmul.f32 %v397, %v410
    %v421 = vmul.f32 %v398, %v410
    %v422 = vmul.f32 %v399, %v410
    %v423 = vmul.f32 %v400, %v410
    %v424 = vmul.f32 %v401, %v410
    %v425 = vmul.f32 %v402, %v410
    %v426 = vmul.f32 %v403, %v410
    %v427 = vmul.f32 %v404, %v410
    %428 = vadd.xlane.f32.xlu0 %v412
    %v429 = vpop.xlane.xlu0 %428
    %430 = vadd.xlane.f32.xlu0 %v413
    %v431 = vpop.xlane.xlu0 %430
    %432 = vadd.xlane.f32.xlu0 %v414
    %v433 = vpop.xlane.xlu0 %432
    %434 = vadd.xlane.f32.xlu0 %v415
    %v435 = vpop.xlane.xlu0 %434
    %436 = vadd.xlane.f32.xlu0 %v416
    %v437 = vpop.xlane.xlu0 %436
    %438 = vadd.xlane.f32.xlu0 %v417
    %v439 = vpop.xlane.xlu0 %438
    %440 = vadd.xlane.f32.xlu0 %v418
    %v441 = vpop.xlane.xlu0 %440
    %442 = vadd.xlane.f32.xlu0 %v419
    %v443 = vpop.xlane.xlu0 %442
    %444 = vadd.xlane.f32.xlu0 %v420
    %v445 = vpop.xlane.xlu0 %444
    %446 = vadd.xlane.f32.xlu0 %v421
    %v447 = vpop.xlane.xlu0 %446
    %448 = vadd.xlane.f32.xlu0 %v422
    %v449 = vpop.xlane.xlu0 %448
    %450 = vadd.xlane.f32.xlu0 %v423
    %v451 = vpop.xlane.xlu0 %450
    %452 = vadd.xlane.f32.xlu0 %v424
    %v453 = vpop.xlane.xlu0 %452
    %454 = vadd.xlane.f32.xlu0 %v425
    %v455 = vpop.xlane.xlu0 %454
    %456 = vadd.xlane.f32.xlu0 %v426
    %v457 = vpop.xlane.xlu0 %456
    %458 = vadd.xlane.f32.xlu0 %v427
    %v459 = vpop.xlane.xlu0 %458
    %v460 = vld [vmem:[%s6] sm:$0x1]
    %v462 = vlaneseq
    %v463 = vshrl.u32 %v462, 7
    %v464 = vsub.s32 0, %v463
    %v465 = vrot.slane %v460, %v464
    %467 = vbcast.lane.b32.xlu0 %v465, 256
    %v468 = vpop.permute.xlu0 %467
    %s470 = sor.u32 256, 8
    %471 = vbcast.lane.b32.xlu0 %v465, %s470
    %v472 = vpop.permute.xlu0 %471
    %s474 = sor.u32 256, 16
    %475 = vbcast.lane.b32.xlu0 %v465, %s474
    %v476 = vpop.permute.xlu0 %475
    %s478 = sor.u32 256, 24
    %479 = vbcast.lane.b32.xlu0 %v465, %s478
    %v480 = vpop.permute.xlu0 %479
    %s482 = sor.u32 256, 32
    %483 = vbcast.lane.b32.xlu0 %v465, %s482
    %v484 = vpop.permute.xlu0 %483
    %s486 = sor.u32 256, 40
    %487 = vbcast.lane.b32.xlu0 %v465, %s486
    %v488 = vpop.permute.xlu0 %487
    %s490 = sor.u32 256, 48
    %491 = vbcast.lane.b32.xlu0 %v465, %s490
    %v492 = vpop.permute.xlu0 %491
    %s494 = sor.u32 256, 56
    %495 = vbcast.lane.b32.xlu0 %v465, %s494
    %v496 = vpop.permute.xlu0 %495
    %s498 = sor.u32 256, 64
    %499 = vbcast.lane.b32.xlu0 %v465, %s498
    %v500 = vpop.permute.xlu0 %499
    %s502 = sor.u32 256, 72
    %503 = vbcast.lane.b32.xlu0 %v465, %s502
    %v504 = vpop.permute.xlu0 %503
    %s506 = sor.u32 256, 80
    %507 = vbcast.lane.b32.xlu0 %v465, %s506
    %v508 = vpop.permute.xlu0 %507
    %s510 = sor.u32 256, 88
    %511 = vbcast.lane.b32.xlu0 %v465, %s510
    %v512 = vpop.permute.xlu0 %511
    %s514 = sor.u32 256, 96
    %515 = vbcast.lane.b32.xlu0 %v465, %s514
    %v516 = vpop.permute.xlu0 %515
    %s518 = sor.u32 256, 104
    %519 = vbcast.lane.b32.xlu0 %v465, %s518
    %v520 = vpop.permute.xlu0 %519
    %s522 = sor.u32 256, 112
    %523 = vbcast.lane.b32.xlu0 %v465, %s522
    %v524 = vpop.permute.xlu0 %523
    %s526 = sor.u32 256, 120
    %527 = vbcast.lane.b32.xlu0 %v465, %s526
    %v528 = vpop.permute.xlu0 %527
    %v545 = vadd.f32 %v429, %v468
    %v546 = vadd.f32 %v431, %v472
    %v547 = vadd.f32 %v433, %v476
    %v548 = vadd.f32 %v435, %v480
    %v549 = vadd.f32 %v437, %v484
    %v550 = vadd.f32 %v439, %v488
    %v551 = vadd.f32 %v441, %v492
    %v552 = vadd.f32 %v443, %v496
    %v553 = vadd.f32 %v445, %v500
    %v554 = vadd.f32 %v447, %v504
    %v555 = vadd.f32 %v449, %v508
    %v556 = vadd.f32 %v451, %v512
    %v557 = vadd.f32 %v453, %v516
    %v558 = vadd.f32 %v455, %v520
    %v559 = vadd.f32 %v457, %v524
    %v560 = vadd.f32 %v459, %v528
    %577 = vset.pattern.permute.xlu0 0
    %578 = vperm.xlu0 %577, %v545
    %v579 = vpop.permute.xlu0 %578
    %580 = vset.pattern.permute.xlu0 0
    %581 = vperm.xlu0 %580, %v546
    %v582 = vpop.permute.xlu0 %581
    %583 = vset.pattern.permute.xlu0 0
    %584 = vperm.xlu0 %583, %v547
    %v585 = vpop.permute.xlu0 %584
    %586 = vset.pattern.permute.xlu0 0
    %587 = vperm.xlu0 %586, %v548
    %v588 = vpop.permute.xlu0 %587
    %589 = vset.pattern.permute.xlu0 0
    %590 = vperm.xlu0 %589, %v549
    %v591 = vpop.permute.xlu0 %590
    %592 = vset.pattern.permute.xlu0 0
    %593 = vperm.xlu0 %592, %v550
    %v594 = vpop.permute.xlu0 %593
    %595 = vset.pattern.permute.xlu0 0
    %596 = vperm.xlu0 %595, %v551
    %v597 = vpop.permute.xlu0 %596
    %598 = vset.pattern.permute.xlu0 0
    %599 = vperm.xlu0 %598, %v552
    %v600 = vpop.permute.xlu0 %599
    %601 = vset.pattern.permute.xlu0 0
    %602 = vperm.xlu0 %601, %v553
    %v603 = vpop.permute.xlu0 %602
    %604 = vset.pattern.permute.xlu0 0
    %605 = vperm.xlu0 %604, %v554
    %v606 = vpop.permute.xlu0 %605
    %607 = vset.pattern.permute.xlu0 0
    %608 = vperm.xlu0 %607, %v555
    %v609 = vpop.permute.xlu0 %608
    %610 = vset.pattern.permute.xlu0 0
    %611 = vperm.xlu0 %610, %v556
    %v612 = vpop.permute.xlu0 %611
    %613 = vset.pattern.permute.xlu0 0
    %614 = vperm.xlu0 %613, %v557
    %v615 = vpop.permute.xlu0 %614
    %616 = vset.pattern.permute.xlu0 0
    %617 = vperm.xlu0 %616, %v558
    %v618 = vpop.permute.xlu0 %617
    %619 = vset.pattern.permute.xlu0 0
    %620 = vperm.xlu0 %619, %v559
    %v621 = vpop.permute.xlu0 %620
    %622 = vset.pattern.permute.xlu0 0
    %623 = vperm.xlu0 %622, %v560
    %v624 = vpop.permute.xlu0 %623
    %v625 = vlaneseq
    %v626 = vand.u32 %v625, 127
    %v627 = vlaneseq
    %v628 = vshrl.u32 %v627, 7
    %v629 = vsub.s32 %v626, %v628
    %v630 = vrot.slane %v579, %v629
    %v631 = vadd.s32 %v626, 4294967288
    %v632 = vlaneseq
    %v633 = vshrl.u32 %v632, 7
    %v634 = vsub.s32 %v631, %v633
    %v635 = vrot.slane %v582, %v634
    %vm636 = vcmask 130112
    %v637 = vsel %vm636, %v635, %v630
    %v638 = vadd.s32 %v626, 4294967280
    %v639 = vlaneseq
    %v640 = vshrl.u32 %v639, 7
    %v641 = vsub.s32 %v638, %v640
    %v642 = vrot.slane %v585, %v641
    %vm643 = vcmask 195712
    %v644 = vsel %vm643, %v642, %v637
    %v645 = vadd.s32 %v626, 4294967272
    %v646 = vlaneseq
    %v647 = vshrl.u32 %v646, 7
    %v648 = vsub.s32 %v645, %v647
    %v649 = vrot.slane %v588, %v648
    %vm650 = vcmask 261312
    %v651 = vsel %vm650, %v649, %v644
    %v652 = vadd.s32 %v626, 4294967264
    %v653 = vlaneseq
    %v654 = vshrl.u32 %v653, 7
    %v655 = vsub.s32 %v652, %v654
    %v656 = vrot.slane %v591, %v655
    %vm657 = vcmask 326912
    %v658 = vsel %vm657, %v656, %v651
    %v659 = vadd.s32 %v626, 4294967256
    %v660 = vlaneseq
    %v661 = vshrl.u32 %v660, 7
    %v662 = vsub.s32 %v659, %v661
    %v663 = vrot.slane %v594, %v662
    %vm664 = vcmask 392512
    %v665 = vsel %vm664, %v663, %v658
    %v666 = vadd.s32 %v626, 4294967248
    %v667 = vlaneseq
    %v668 = vshrl.u32 %v667, 7
    %v669 = vsub.s32 %v666, %v668
    %v670 = vrot.slane %v597, %v669
    %vm671 = vcmask 458112
    %v672 = vsel %vm671, %v670, %v665
    %v673 = vadd.s32 %v626, 4294967240
    %v674 = vlaneseq
    %v675 = vshrl.u32 %v674, 7
    %v676 = vsub.s32 %v673, %v675
    %v677 = vrot.slane %v600, %v676
    %vm678 = vcmask 523712
    %v679 = vsel %vm678, %v677, %v672
    %v680 = vadd.s32 %v626, 4294967232
    %v681 = vlaneseq
    %v682 = vshrl.u32 %v681, 7
    %v683 = vsub.s32 %v680, %v682
    %v684 = vrot.slane %v603, %v683
    %vm685 = vcmask 589312
    %v686 = vsel %vm685, %v684, %v679
    %v687 = vadd.s32 %v626, 4294967224
    %v688 = vlaneseq
    %v689 = vshrl.u32 %v688, 7
    %v690 = vsub.s32 %v687, %v689
    %v691 = vrot.slane %v606, %v690
    %vm692 = vcmask 654912
    %v693 = vsel %vm692, %v691, %v686
    %v694 = vadd.s32 %v626, 4294967216
    %v695 = vlaneseq
    %v696 = vshrl.u32 %v695, 7
    %v697 = vsub.s32 %v694, %v696
    %v698 = vrot.slane %v609, %v697
    %vm699 = vcmask 720512
    %v700 = vsel %vm699, %v698, %v693
    %v701 = vadd.s32 %v626, 4294967208
    %v702 = vlaneseq
    %v703 = vshrl.u32 %v702, 7
    %v704 = vsub.s32 %v701, %v703
    %v705 = vrot.slane %v612, %v704
    %vm706 = vcmask 786112
    %v707 = vsel %vm706, %v705, %v700
    %v708 = vadd.s32 %v626, 4294967200
    %v709 = vlaneseq
    %v710 = vshrl.u32 %v709, 7
    %v711 = vsub.s32 %v708, %v710
    %v712 = vrot.slane %v615, %v711
    %vm713 = vcmask 851712
    %v714 = vsel %vm713, %v712, %v707
    %v715 = vadd.s32 %v626, 4294967192
    %v716 = vlaneseq
    %v717 = vshrl.u32 %v716, 7
    %v718 = vsub.s32 %v715, %v717
    %v719 = vrot.slane %v618, %v718
    %vm720 = vcmask 917312
    %v721 = vsel %vm720, %v719, %v714
    %v722 = vadd.s32 %v626, 4294967184
    %v723 = vlaneseq
    %v724 = vshrl.u32 %v723, 7
    %v725 = vsub.s32 %v722, %v724
    %v726 = vrot.slane %v621, %v725
    %vm727 = vcmask 982912
    %v728 = vsel %vm727, %v726, %v721
    %v729 = vadd.s32 %v626, 4294967176
    %v730 = vlaneseq
    %v731 = vshrl.u32 %v730, 7
    %v732 = vsub.s32 %v729, %v731
    %v733 = vrot.slane %v624, %v732
    %vm734 = vcmask 1048512
    %v735 = vsel %vm734, %v733, %v728
    %737 = vst [vmem:[#allocation2] sm:$0x1] %v735
    // Predicated region
    $region30: #{tpu_custom_call.1} parent=1 // pred_check
      _
    $region31: #{tpu_custom_call.1} parent=1 // pred_check_branch
      %739 = sbr.rel (0) target = $region33
    $region32: #{tpu_custom_call.1} parent=1 // pred_region
      %s741 = ssub.s32 16, 16
      %742 = vsyncadd [#allocation3], %s741
      %s744 = sshll.u32 [#allocation2], 4
      %s745 = int_to_ptr.vmem [resolvable:$true] %s744
      %747 = dma.vmem_to_hbm [thread:$0]  %s745, 16, %s7, [#allocation3]
    $region33: #{tpu_custom_call.1} parent=1 // pred_fallthru
      _
    // Predicated region
    $region34: #{tpu_custom_call.1} parent=1 // pred_check
      _
    $region35: #{tpu_custom_call.1} parent=1 // pred_check_branch
      %749 = sbr.rel (0) target = $region37
    $region36: #{tpu_custom_call.1} parent=1 // pred_region
      %750 = dma.done [#allocation3], 16
    $region37: #{tpu_custom_call.1} parent=1 // pred_fallthru
      _
    %751 = vsyncpa [#allocation3], 1

</llo_original>
